<compile_context>
chip_gen: v7x
topology: tpu7x:2x2x1
jax: 0.10.0
libtpu: 0.0.40
codegen_flags: <defaults>
</compile_context>

<pallas_src>
import jax
import jax.numpy as jnp
from jax.experimental import pallas as pl
from jax.experimental.pallas import tpu as pltpu


NUM_TERMS = 10  # Config.num_terms


def _round_up(v, m):
    return (v + m - 1) // m * m


def _modular_form_kernel(x_ref, params_ref, sel_ref, o_ref):
    # x_ref     : (TILE, Fp) float32   -- Fp = R * F lane-packed batch rows
    # params_ref: (3, Fp)   float32    -- rows: tiled n, tiled Re(c), tiled Im(c)
    # sel_ref   : (Fp, 128) float32    -- 0/1 segment-sum selector, S[j, j//F] = 1
    # o_ref     : (TILE, 128) float32  -- column r holds result of packed row r
    x = x_ref[...]                                   # (TILE, Fp)
    n = params_ref[pl.ds(0, 1), :]                   # (1, Fp), broadcasts over sublanes
    cr = params_ref[pl.ds(1, 1), :]
    ci = params_ref[pl.ds(2, 1), :]

    phase = n * x                                    # (TILE, Fp)
    val = cr * jnp.cos(phase) - ci * jnp.sin(phase)  # Re(c * exp(1j n x))

    # Segmented sum over each group of F lanes -> lane-dense output, on the MXU.
    o_ref[...] = jnp.dot(val, sel_ref[...], preferred_element_type=jnp.float32)


def modular_form_activation(x, coeffs_real, coeffs_imag, *, tile=512):
    """x: (batch, features) with features == num_terms. Returns (batch,) float32."""
    b, f = x.shape
    assert coeffs_real.shape == (f,) and coeffs_imag.shape == (f,), (
        "features must equal num_terms (forward semantics of the module)")

    r = max(1, 128 // f)        # batch rows packed per vreg row (12 for f=10)
    fp = r * f                  # packed lane width (120 for f=10)

    # Choose a batch tile (in packed rows): multiple of 8, at most `tile`.
    bp_needed = pl.cdiv(b, r)
    tile = min(tile, _round_up(bp_needed, 8))
    n_tiles = pl.cdiv(bp_needed, tile)
    bp = n_tiles * tile         # padded packed-row count
    b_pad = bp * r              # padded original-row count

    xf = x.astype(jnp.float32)
    if b_pad != b:
        xf = jnp.pad(xf, ((0, b_pad - b), (0, 0)))
    # Free row-major reshape: 12 consecutive batch rows share one packed row.
    x_packed = xf.reshape(bp, fp)

    # Fused constant parameters: n, Re(coeffs), Im(coeffs), each tiled to fp lanes.
    n_row = jnp.arange(1, f + 1, dtype=jnp.float32)
    params = jnp.stack([
        jnp.tile(n_row, r),
        jnp.tile(coeffs_real.astype(jnp.float32), r),
        jnp.tile(coeffs_imag.astype(jnp.float32), r),
    ])                                                       # (3, fp)

    # 0/1 selector: lane j contributes to output column j // f.
    sel = (jnp.arange(fp)[:, None] // f
           == jnp.arange(128)[None, :]).astype(jnp.float32)  # (fp, 128)

    out = pl.pallas_call(
        _modular_form_kernel,
        out_shape=jax.ShapeDtypeStruct((bp, 128), jnp.float32),
        grid=(n_tiles,),
        in_specs=[
            pl.BlockSpec((tile, fp), lambda i: (i, 0)),   # batch-tiled input
            pl.BlockSpec((3, fp), lambda i: (0, 0)),      # grid-invariant params
            pl.BlockSpec((fp, 128), lambda i: (0, 0)),    # grid-invariant selector
        ],
        out_specs=pl.BlockSpec((tile, 128), lambda i: (i, 0)),
        compiler_params=pltpu.CompilerParams(
            dimension_semantics=("parallel",)),
    )(x_packed, params, sel)

    # Column r of packed row p is original row p*r + r  ->  row-major unpack.
    return out[:, :r].reshape(bp * r)[:b]


def _reference(x, coeffs_real, coeffs_imag):
    f = x.shape[-1]
    n = jnp.arange(1, f + 1, dtype=jnp.float32).reshape(1, f)
    coeffs = coeffs_real + 1j * coeffs_imag
    y = coeffs[None, :] * jnp.exp(1j * n * x)      # (B, F) complex
    return jnp.real(jnp.sum(y, axis=-1))


if __name__ == "__main__":
    key = jax.random.PRNGKey(0)
    k_x, k_cr, k_ci = jax.random.split(key, 3)

    batch = 64                # Config.batch_size
    features = NUM_TERMS      # forward semantics require features == num_terms

    x = jax.random.normal(k_x, (batch, features), dtype=jnp.float32)
    # Deterministic stand-in for torch.randn(num_terms, dtype=cfloat) * 0.1
    coeffs_real = jax.random.normal(k_cr, (NUM_TERMS,), dtype=jnp.float32) * 0.1
    coeffs_imag = jax.random.normal(k_ci, (NUM_TERMS,), dtype=jnp.float32) * 0.1

    out = modular_form_activation(x, coeffs_real, coeffs_imag)
    out = jax.block_until_ready(out)

    ref = _reference(x, coeffs_real, coeffs_imag)
    assert out.shape == (batch,)
    assert jnp.allclose(out, ref, atol=1e-4, rtol=1e-4), (out, ref)

    print("KERNEL_OK")
</pallas_src>

<mosaic_0001>
module attributes {stable_mosaic.version = 11 : i64} {
  func.func @_modular_form_kernel(%arg0: i32, %arg1: memref<8x120xf32, #tpu.memory_space<vmem>>, %arg2: memref<3x120xf32, #tpu.memory_space<vmem>>, %arg3: memref<120x128xf32, #tpu.memory_space<vmem>>, %arg4: memref<8x128xf32, #tpu.memory_space<vmem>>) attributes {dimension_semantics = [#tpu.dimension_semantics<parallel>], iteration_bounds = array<i64: 1>, scalar_prefetch = 0 : i64, scratch_operands = 0 : i64, tpu.core_type = #tpu.core_type<tc>, window_params = [{transform_indices = @transform_0, window_bounds = array<i64: 8, 120>}, {pipeline_mode = #tpu.pipeline_mode<synchronous>, transform_indices = @transform_1, window_bounds = array<i64: 3, 120>}, {pipeline_mode = #tpu.pipeline_mode<synchronous>, transform_indices = @transform_2, window_bounds = array<i64: 120, 128>}, {transform_indices = @transform_3, window_bounds = array<i64: 8, 128>}]} {
    %c0 = arith.constant 0 : index
    %c0_0 = arith.constant 0 : index
    %0 = vector.load %arg1[%c0, %c0_0] : memref<8x120xf32, #tpu.memory_space<vmem>>, vector<8x120xf32>
    %c0_1 = arith.constant 0 : index
    %c0_2 = arith.constant 0 : index
    %1 = vector.load %arg2[%c0_1, %c0_2] : memref<3x120xf32, #tpu.memory_space<vmem>>, vector<1x120xf32>
    %c1 = arith.constant 1 : index
    %c0_3 = arith.constant 0 : index
    %2 = vector.load %arg2[%c1, %c0_3] : memref<3x120xf32, #tpu.memory_space<vmem>>, vector<1x120xf32>
    %c2 = arith.constant 2 : index
    %c0_4 = arith.constant 0 : index
    %3 = vector.load %arg2[%c2, %c0_4] : memref<3x120xf32, #tpu.memory_space<vmem>>, vector<1x120xf32>
    %4 = vector.broadcast %1 : vector<1x120xf32> to vector<8x120xf32>
    %5 = arith.mulf %4, %0 : vector<8x120xf32>
    %6 = math.cos %5 : vector<8x120xf32>
    %7 = vector.broadcast %2 : vector<1x120xf32> to vector<8x120xf32>
    %8 = arith.mulf %7, %6 : vector<8x120xf32>
    %9 = math.sin %5 : vector<8x120xf32>
    %10 = vector.broadcast %3 : vector<1x120xf32> to vector<8x120xf32>
    %11 = arith.mulf %10, %9 : vector<8x120xf32>
    %12 = arith.subf %8, %11 : vector<8x120xf32>
    %c0_5 = arith.constant 0 : index
    %c0_6 = arith.constant 0 : index
    %13 = vector.load %arg3[%c0_5, %c0_6] : memref<120x128xf32, #tpu.memory_space<vmem>>, vector<120x128xf32>
    %cst = arith.constant dense<0.000000e+00> : vector<8x128xf32>
    %14 = tpu.matmul %12, %13, %cst {dimension_numbers = #tpu.dot_dimension_numbers<[1], [0], [0], [1], [0, 0, 1, 1], [], []>} : vector<8x120xf32>, vector<120x128xf32>, vector<8x128xf32> -> vector<8x128xf32>
    %c0_7 = arith.constant 0 : index
    %c0_8 = arith.constant 0 : index
    %15 = vector.load %arg4[%c0_7, %c0_8] : memref<8x128xf32, #tpu.memory_space<vmem>>, vector<8x128xf32>
    tpu.vector_store %arg4[%c0_7, %c0_8], %14 {strides = array<i32>} : memref<8x128xf32, #tpu.memory_space<vmem>>, vector<8x128xf32>,
    return
  }
  func.func @transform_0(%arg0: i32) -> (i32, i32) {
    %c0_i32 = arith.constant 0 : i32
    %c0_i32_0 = arith.constant 0 : i32
    return %arg0, %c0_i32 : i32, i32
  }
  func.func @transform_1(%arg0: i32) -> (i32, i32) {
    %c0_i32 = arith.constant 0 : i32
    %c0_i32_0 = arith.constant 0 : i32
    %c0_i32_1 = arith.constant 0 : i32
    return %c0_i32, %c0_i32_0 : i32, i32
  }
  func.func @transform_2(%arg0: i32) -> (i32, i32) {
    %c0_i32 = arith.constant 0 : i32
    %c0_i32_0 = arith.constant 0 : i32
    %c0_i32_1 = arith.constant 0 : i32
    return %c0_i32, %c0_i32_0 : i32, i32
  }
  func.func @transform_3(%arg0: i32) -> (i32, i32) {
    %c0_i32 = arith.constant 0 : i32
    %c0_i32_0 = arith.constant 0 : i32
    return %arg0, %c0_i32 : i32, i32
  }
}

</mosaic_0001>

<llo_original>
// kernel: tpu_custom_call.1
$region0: #{tpu_custom_call.1}
  #allocation0 [shape = 'u32[]', space=smem, size = 0x4, offset = 0x4, fixed_abs, tag = 'smem constant byte address 0x4 - core index']
  #allocation1 [shape = 'u32[144,128]{1,0:T(1,128)}', space=vmem, size = 0x12000, scoped, tag = 'internal scratch']
  %s0 = inlined_call_operand.hbm [shape: f32[8,120], index: 0, kind: input, shape index: {}]
  %s1 = inlined_call_operand.hbm [shape: f32[3,120], index: 1, kind: input, shape index: {}]
  %s2 = inlined_call_operand.hbm [shape: f32[120,128], index: 2, kind: input, shape index: {}]
  %s3 = inlined_call_operand.hbm [shape: f32[8,128], index: 3, kind: output, shape index: {}]
  %s4 = sld [smem:[#allocation0]]
  $region34: #{tpu_custom_call.1} parent=0
    _
  %s6 = ssub.s32 1, %s4
  %s7 = scalar_select 0, %s6, %s4
  $region1: #{tpu_custom_call.1} parent=0
    #allocation2 [shape = 'u8[4096]{0}', space=vmem, size = 0x1000, scoped, tag = 'input window, operand 0, single buffered']
    #allocation3 [shape = 's32[1]{0}', space=sflag, size = 0x4, scoped, tag = 'scoped memory for tpu_custom_call.1']
    #allocation4 [shape = 's32[1]{0}', space=sflag, size = 0x4, scoped, tag = 'scoped memory for tpu_custom_call.1']
    #allocation5 [shape = 'u8[2048]{0}', space=vmem, size = 0x800, scoped, tag = 'input window, operand 1, single buffered']
    #allocation6 [shape = 's32[1]{0}', space=sflag, size = 0x4, scoped, tag = 'scoped memory for tpu_custom_call.1']
    #allocation7 [shape = 'u8[61440]{0}', space=vmem, size = 0xf000, scoped, tag = 'input window, operand 2, single buffered']
    #allocation8 [shape = 'u8[4096]{0}', space=vmem, size = 0x1000, scoped, tag = 'output window, operand 0, single buffered']
    %8 = vsyncpa [#allocation3], 0
    %9 = vsyncpa [#allocation6], 0
    %10 = vsyncpa [#allocation4], 0
    // Predicated region
    $region2: #{tpu_custom_call.1} parent=1 // pred_check
      _
    $region3: #{tpu_custom_call.1} parent=1 // pred_check_branch
      %12 = sbr.rel (0) target = $region5
    $region4: #{tpu_custom_call.1} parent=1 // pred_region
      %s14 = ssub.s32 128, 128
      %15 = vsyncadd [#allocation3], %s14
      %s17 = sshll.u32 [#allocation2], 4
      %s18 = int_to_ptr.vmem [resolvable:$true] %s17
      %20 = dma.hbm_to_vmem [thread:$0]  %s0, 128, %s18, [#allocation3]
    $region5: #{tpu_custom_call.1} parent=1 // pred_fallthru
      _
    // Predicated region
    $region6: #{tpu_custom_call.1} parent=1 // pred_check
      _
    $region7: #{tpu_custom_call.1} parent=1 // pred_check_branch
      %22 = sbr.rel (0) target = $region9
    $region8: #{tpu_custom_call.1} parent=1 // pred_region
      %s24 = ssub.s32 64, 64
      %25 = vsyncadd [#allocation6], %s24
      %s27 = sshll.u32 [#allocation5], 4
      %s28 = int_to_ptr.vmem [resolvable:$true] %s27
      %30 = dma.hbm_to_vmem [thread:$0]  %s1, 64, %s28, [#allocation6]
    $region9: #{tpu_custom_call.1} parent=1 // pred_fallthru
      _
    // Predicated region
    $region10: #{tpu_custom_call.1} parent=1 // pred_check
      _
    $region11: #{tpu_custom_call.1} parent=1 // pred_check_branch
      %32 = sbr.rel (0) target = $region13
    $region12: #{tpu_custom_call.1} parent=1 // pred_region
      %s34 = ssub.s32 1920, 1920
      %35 = vsyncadd [#allocation6], %s34
      %s36 = sshll.u32 [#allocation7], 4
      %s37 = int_to_ptr.vmem [resolvable:$true] %s36
      %42 = dma.hbm_to_vmem [thread:$0]  %s2, 1920, %s37, [#allocation6], 128, 128, 8
    $region13: #{tpu_custom_call.1} parent=1 // pred_fallthru
      _
    // Predicated region
    $region14: #{tpu_custom_call.1} parent=1 // pred_check
      _
    $region15: #{tpu_custom_call.1} parent=1 // pred_check_branch
      %44 = sbr.rel (0) target = $region17
    $region16: #{tpu_custom_call.1} parent=1 // pred_region
      %45 = dma.done [#allocation3], 128
    $region17: #{tpu_custom_call.1} parent=1 // pred_fallthru
      _
    // Predicated region
    $region18: #{tpu_custom_call.1} parent=1 // pred_check
      _
    $region19: #{tpu_custom_call.1} parent=1 // pred_check_branch
      %47 = sbr.rel (0) target = $region21
    $region20: #{tpu_custom_call.1} parent=1 // pred_region
      %48 = dma.done [#allocation6], 64
    $region21: #{tpu_custom_call.1} parent=1 // pred_fallthru
      _
    // Predicated region
    $region22: #{tpu_custom_call.1} parent=1 // pred_check
      _
    $region23: #{tpu_custom_call.1} parent=1 // pred_check_branch
      %50 = sbr.rel (0) target = $region25
    $region24: #{tpu_custom_call.1} parent=1 // pred_region
      %51 = dma.done [#allocation6], 1920
    $region25: #{tpu_custom_call.1} parent=1 // pred_fallthru
      _
    %v52 = vld [vmem:[#allocation2] sm:$0xff]
    %v53 = vld [vmem:[#allocation5] sm:$0x1]
    %v54 = vld [vmem:[#allocation5 + $0x1] sm:$0x1]
    %v55 = vld [vmem:[#allocation5 + $0x2] sm:$0x1]
    %v56 = vlaneseq
    %v57 = vshrl.u32 %v56, 7
    %v58 = vsub.s32 0, %v57
    %v59 = vrot.slane %v53, %v58
    %v60 = vmul.f32 %v59, %v52
    %v61 = vand.u32 2147483647, %v60
    %vm62 = vcmp.le.f32.partialorder %v61, 0.7853982
    %vm63 = vcmp.lt.s32.totalorder %v60, 0
    %v64 = vand.u32 %v60, 2139095040
    %v65 = vshrl.u32 %v64, 23
    %v66 = vsub.s32 %v65, 127
    %v67 = vand.u32 2147483647, %v60
    %v68 = vand.u32 %v67, 8388607
    %v69 = vor.u32 %v68, 8388608
    %v70 = vsub.s32 0, %v69
    %v71 = vadd.s32 %v66, 1
    %vm72 = vcmp.gt.s32.totalorder %v71, 0
    %v73 = vsel %vm72, %v71, 0
    %v74 = vshrl.u32 %v73, 5
    %v75 = vand.u32 %v73, 31
    %v76 = vsub.s32 32, %v75
    %v77 = vshrl.u32 683565275, %v76
    %v78 = vshll.u32 683565275, %v75
    %v79 = vshrl.u32 2475754826, %v76
    %v80 = vor.u32 %v78, %v79
    %v81 = vshll.u32 2475754826, %v75
    %v82 = vshrl.u32 2131351028, %v76
    %v83 = vor.u32 %v81, %v82
    %v84 = vshll.u32 2131351028, %v75
    %v85 = vshrl.u32 2102212464, %v76
    %v86 = vor.u32 %v84, %v85
    %v87 = vshll.u32 2102212464, %v75
    %v88 = vshrl.u32 920167782, %v76
    %v89 = vor.u32 %v87, %v88
    %v90 = vshll.u32 920167782, %v75
    %v91 = vshrl.u32 1326507024, %v76
    %v92 = vor.u32 %v90, %v91
    %vm93 = vcmp.lt.s32.totalorder %v74, 1
    %vm94 = vcmp.lt.s32.totalorder %v74, 2
    %vm95 = vcmp.lt.s32.totalorder %v74, 3
    %vm96 = vcmp.lt.s32.totalorder %v74, 4
    %v97 = vsel %vm93, %v77, %v80
    %v98 = vsel %vm96, %v86, 2102212464
    %v99 = vsel %vm95, %v83, %v98
    %v100 = vsel %vm94, %v97, %v99
    %v101 = vsel %vm93, %v80, %v83
    %v102 = vsel %vm96, %v89, 920167782
    %v103 = vsel %vm95, %v86, %v102
    %v104 = vsel %vm94, %v101, %v103
    %v105 = vsel %vm93, %v83, %v86
    %v106 = vsel %vm96, %v92, 1326507024
    %v107 = vsel %vm95, %v89, %v106
    %v108 = vsel %vm94, %v105, %v107
    %v109 = vshll.u32 %v69, 8
    %v110 = vmul.u32.u64.compose %v109, %v108
    %v111 = vextract.low.u32 %v110
    %v112 = vextract.high.u32 %v110
    %v113 = vmul.u32.u64.compose %v109, %v104
    %v114 = vextract.low.u32 %v113
    %v115 = vextract.high.u32 %v113
    %v116 = vmul.u32 %v109, %v100
    %v117 = vadd.s32 %v112, %v114
    %vm118 = vc.u32 %v112, %v114
    %v119 = vadd.s32 %v115, 1
    %v120 = vsel %vm118, %v119, %v115
    %v121 = vadd.s32 %v116, %v120
    %v122 = vadd.s32 %v121, 536870912
    %v123 = vshrl.u32 %v122, 30
    %v124 = vshll.u32 %v123, 30
    %v125 = vsub.s32 %v121, %v124
    %vm126 = vcmp.lt.s32.totalorder %v125, 0
    %v127 = vsub.s32 0, %v125
    %v128 = vsel %vm126, %v127, %v125
    %v129 = vclz %v128
    %v130 = vsub.s32 %v129, 2
    %vm131 = vcmp.gt.s32.totalorder 0, %v130
    %v132 = vsel %vm131, 0, %v130
    %v133 = vsub.s32 32, %v132
    %v134 = vshll.u32 %v125, %v132
    %v135 = vshrl.u32 %v117, %v133
    %v136 = vor.u32 %v134, %v135
    %v137 = vsub.s32 4294967266, %v132
    %v138 = vadd.s32 %v137, 127
    %v139 = vshll.u32 %v138, 23
    %v140 = vor.u32 4788187, %v139
    %v141 = vand.u32 2147483647, %v140
    %v143 = vcvt.s32.f32 %v136
    %v144 = vmul.f32 %v143, %v141
    %v145 = vxor.u32 %v144, 2147483648
    %v146 = vsel %vm63, %v145, %v144
    %v147 = vsub.s32 4, %v123
    %v148 = vsel %vm63, %v147, %v123
    %v149 = vsel %vm62, %v60, %v146
    %v150 = vsel %vm62, 0, %v148
    %v151 = vcosq.f32.pop %v149
    %v152 = vsinq.f32.pop %v149
    %vm153 = vweird.f32 %v60
    %v154 = vand.u32 %v150, 3
    %vm155 = vcmp.lt.s32.totalorder %v154, 2
    %vm156 = vcmp.eq.s32.totalorder %v154, 0
    %v157 = vxor.u32 %v152, 2147483648
    %v158 = vsel %vm156, %v151, %v157
    %vm159 = vcmp.eq.s32.totalorder %v154, 2
    %v160 = vxor.u32 %v151, 2147483648
    %v161 = vsel %vm159, %v160, %v152
    %v162 = vsel %vm155, %v158, %v161
    %v163 = vsel %vm153, nan, %v162
    %v164 = vlaneseq
    %v165 = vshrl.u32 %v164, 7
    %v166 = vsub.s32 0, %v165
    %v167 = vrot.slane %v54, %v166
    %v168 = vmul.f32 %v167, %v163
    %v169 = vand.u32 2147483647, %v60
    %vm170 = vcmp.le.f32.partialorder %v169, 0.7853982
    %vm171 = vcmp.lt.s32.totalorder %v60, 0
    %v172 = vand.u32 %v60, 2139095040
    %v173 = vshrl.u32 %v172, 23
    %v174 = vsub.s32 %v173, 127
    %v175 = vand.u32 2147483647, %v60
    %v176 = vand.u32 %v175, 8388607
    %v177 = vor.u32 %v176, 8388608
    %v178 = vsub.s32 0, %v177
    %v179 = vadd.s32 %v174, 1
    %vm180 = vcmp.gt.s32.totalorder %v179, 0
    %v181 = vsel %vm180, %v179, 0
    %v182 = vshrl.u32 %v181, 5
    %v183 = vand.u32 %v181, 31
    %v184 = vsub.s32 32, %v183
    %v185 = vshrl.u32 683565275, %v184
    %v186 = vshll.u32 683565275, %v183
    %v187 = vshrl.u32 2475754826, %v184
    %v188 = vor.u32 %v186, %v187
    %v189 = vshll.u32 2475754826, %v183
    %v190 = vshrl.u32 2131351028, %v184
    %v191 = vor.u32 %v189, %v190
    %v192 = vshll.u32 2131351028, %v183
    %v193 = vshrl.u32 2102212464, %v184
    %v194 = vor.u32 %v192, %v193
    %v195 = vshll.u32 2102212464, %v183
    %v196 = vshrl.u32 920167782, %v184
    %v197 = vor.u32 %v195, %v196
    %v198 = vshll.u32 920167782, %v183
    %v199 = vshrl.u32 1326507024, %v184
    %v200 = vor.u32 %v198, %v199
    %vm201 = vcmp.lt.s32.totalorder %v182, 1
    %vm202 = vcmp.lt.s32.totalorder %v182, 2
    %vm203 = vcmp.lt.s32.totalorder %v182, 3
    %vm204 = vcmp.lt.s32.totalorder %v182, 4
    %v205 = vsel %vm201, %v185, %v188
    %v206 = vsel %vm204, %v194, 2102212464
    %v207 = vsel %vm203, %v191, %v206
    %v208 = vsel %vm202, %v205, %v207
    %v209 = vsel %vm201, %v188, %v191
    %v210 = vsel %vm204, %v197, 920167782
    %v211 = vsel %vm203, %v194, %v210
    %v212 = vsel %vm202, %v209, %v211
    %v213 = vsel %vm201, %v191, %v194
    %v214 = vsel %vm204, %v200, 1326507024
    %v215 = vsel %vm203, %v197, %v214
    %v216 = vsel %vm202, %v213, %v215
    %v217 = vshll.u32 %v177, 8
    %v218 = vmul.u32.u64.compose %v217, %v216
    %v219 = vextract.low.u32 %v218
    %v220 = vextract.high.u32 %v218
    %v221 = vmul.u32.u64.compose %v217, %v212
    %v222 = vextract.low.u32 %v221
    %v223 = vextract.high.u32 %v221
    %v224 = vmul.u32 %v217, %v208
    %v225 = vadd.s32 %v220, %v222
    %vm226 = vc.u32 %v220, %v222
    %v227 = vadd.s32 %v223, 1
    %v228 = vsel %vm226, %v227, %v223
    %v229 = vadd.s32 %v224, %v228
    %v230 = vadd.s32 %v229, 536870912
    %v231 = vshrl.u32 %v230, 30
    %v232 = vshll.u32 %v231, 30
    %v233 = vsub.s32 %v229, %v232
    %vm234 = vcmp.lt.s32.totalorder %v233, 0
    %v235 = vsub.s32 0, %v233
    %v236 = vsel %vm234, %v235, %v233
    %v237 = vclz %v236
    %v238 = vsub.s32 %v237, 2
    %vm239 = vcmp.gt.s32.totalorder 0, %v238
    %v240 = vsel %vm239, 0, %v238
    %v241 = vsub.s32 32, %v240
    %v242 = vshll.u32 %v233, %v240
    %v243 = vshrl.u32 %v225, %v241
    %v244 = vor.u32 %v242, %v243
    %v245 = vsub.s32 4294967266, %v240
    %v246 = vadd.s32 %v245, 127
    %v247 = vshll.u32 %v246, 23
    %v248 = vor.u32 4788187, %v247
    %v249 = vand.u32 2147483647, %v248
    %v251 = vcvt.s32.f32 %v244
    %v252 = vmul.f32 %v251, %v249
    %v253 = vxor.u32 %v252, 2147483648
    %v254 = vsel %vm171, %v253, %v252
    %v255 = vsub.s32 4, %v231
    %v256 = vsel %vm171, %v255, %v231
    %v257 = vsel %vm170, %v60, %v254
    %v258 = vsel %vm170, 0, %v256
    %v259 = vcosq.f32.pop %v257
    %v260 = vsinq.f32.pop %v257
    %vm261 = vweird.f32 %v60
    %v262 = vadd.s32 %v258, 3
    %v263 = vand.u32 %v262, 3
    %vm264 = vcmp.lt.s32.totalorder %v263, 2
    %vm265 = vcmp.eq.s32.totalorder %v263, 0
    %v266 = vxor.u32 %v260, 2147483648
    %v267 = vsel %vm265, %v259, %v266
    %vm268 = vcmp.eq.s32.totalorder %v263, 2
    %v269 = vxor.u32 %v259, 2147483648
    %v270 = vsel %vm268, %v269, %v260
    %v271 = vsel %vm264, %v267, %v270
    %v272 = vsel %vm261, nan, %v271
    %v273 = vlaneseq
    %v274 = vshrl.u32 %v273, 7
    %v275 = vsub.s32 0, %v274
    %v276 = vrot.slane %v55, %v275
    %v277 = vmul.f32 %v276, %v272
    %v278 = vsub.f32 %v168, %v277
    %v279 = vld [vmem:[#allocation7] sm:$0xff]
    %v280 = vld [vmem:[#allocation7 + $0x8] sm:$0xff]
    %v281 = vld [vmem:[#allocation7 + $0x10] sm:$0xff]
    %v282 = vld [vmem:[#allocation7 + $0x18] sm:$0xff]
    %v283 = vld [vmem:[#allocation7 + $0x20] sm:$0xff]
    %v284 = vld [vmem:[#allocation7 + $0x28] sm:$0xff]
    %v285 = vld [vmem:[#allocation7 + $0x30] sm:$0xff]
    %v286 = vld [vmem:[#allocation7 + $0x38] sm:$0xff]
    %v287 = vld [vmem:[#allocation7 + $0x40] sm:$0xff]
    %v288 = vld [vmem:[#allocation7 + $0x48] sm:$0xff]
    %v289 = vld [vmem:[#allocation7 + $0x50] sm:$0xff]
    %v290 = vld [vmem:[#allocation7 + $0x58] sm:$0xff]
    %v291 = vld [vmem:[#allocation7 + $0x60] sm:$0xff]
    %v292 = vld [vmem:[#allocation7 + $0x68] sm:$0xff]
    %v293 = vld [vmem:[#allocation7 + $0x70] sm:$0xff]
    %vm294 = vcmask 982016
    %v296 = vsel %vm294, %v278, 0
    %298 = vmatprep.subr.mxu0 0.0
    %299 = vmatpush1.msra.mxu0 %v279
    %300 = vmatprep.subr.mxu0 0.0
    %301 = vmatpush1.msra.mxu0 %v280
    %302 = vmatprep.subr.mxu0 0.0
    %303 = vmatpush1.msra.mxu0 %v281
    %304 = vmatprep.subr.mxu0 0.0
    %305 = vmatpush1.msra.mxu0 %v282
    %306 = vmatprep.subr.mxu0 0.0
    %307 = vmatpush1.msra.mxu0 %v283
    %308 = vmatprep.subr.mxu0 0.0
    %309 = vmatpush1.msra.mxu0 %v284
    %310 = vmatprep.subr.mxu0 0.0
    %311 = vmatpush1.msra.mxu0 %v285
    %312 = vmatprep.subr.mxu0 0.0
    %313 = vmatpush1.msra.mxu0 %v286
    %314 = vmatprep.subr.mxu0 0.0
    %315 = vmatpush1.msra.mxu0 %v287
    %316 = vmatprep.subr.mxu0 0.0
    %317 = vmatpush1.msra.mxu0 %v288
    %318 = vmatprep.subr.mxu0 0.0
    %319 = vmatpush1.msra.mxu0 %v289
    %320 = vmatprep.subr.mxu0 0.0
    %321 = vmatpush1.msra.mxu0 %v290
    %322 = vmatprep.subr.mxu0 0.0
    %323 = vmatpush1.msra.mxu0 %v291
    %324 = vmatprep.subr.mxu0 0.0
    %325 = vmatpush1.msra.mxu0 %v292
    %326 = vmatprep.subr.mxu0 0.0
    %327 = vmatpush1.msra.mxu0 %v293
    %328 = vmatprep.subr.mxu0 0.0
    %329 = vmatpush1.msra.mxu0 0.0
    %330 = vmatprep.subr.mxu0 0.0
    %331 = vmatpush1.msra.mxu0 0.0
    %332 = vmatprep.subr.mxu0 0.0
    %333 = vmatpush1.msra.mxu0 0.0
    %334 = vmatprep.subr.mxu0 0.0
    %335 = vmatpush1.msra.mxu0 0.0
    %336 = vmatprep.subr.mxu0 0.0
    %337 = vmatpush1.msra.mxu0 0.0
    %338 = vmatprep.subr.mxu0 0.0
    %339 = vmatpush1.msra.mxu0 0.0
    %340 = vmatprep.subr.mxu0 0.0
    %341 = vmatpush1.msra.mxu0 0.0
    %342 = vmatprep.subr.mxu0 0.0
    %343 = vmatpush1.msra.mxu0 0.0
    %344 = vmatprep.subr.mxu0 0.0
    %345 = vmatpush1.msra.mxu0 0.0
    %346 = vmatprep.subr.mxu0 0.0
    %347 = vmatpush1.msra.mxu0 0.0
    %348 = vmatprep.subr.mxu0 0.0
    %349 = vmatpush1.msra.mxu0 0.0
    %350 = vmatprep.subr.mxu0 0.0
    %351 = vmatpush1.msra.mxu0 0.0
    %352 = vmatprep.subr.mxu0 0.0
    %353 = vmatpush1.msra.mxu0 0.0
    %354 = vmatprep.subr.mxu0 0.0
    %355 = vmatpush1.msra.mxu0 0.0
    %356 = vmatprep.subr.mxu0 0.0
    %357 = vmatpush1.msra.mxu0 0.0
    %358 = vmatprep.subr.mxu0 0.0
    %359 = vmatpush1.msra.mxu0 0.0
    %360 = vmatprep.subr.mxu0 0.0
    %361 = vmatpush1.msra.mxu0 0.0
    %362 = vmatprep.mubr.f32.mxu0 0.0
    %363 = vmatmul.mubr.f32.gmra.mrb[0].mxu0 %v296
    %v364 = vpop.f32.mrb[0].mxu0
    %v365 = vadd.f32 0.0, %v364
    %v366 = vpop.f32.mrb[0].mxu0
    %367 = vdwg.mxu0
    %368 = vst [vmem:[#allocation8] sm:$0xff] %v365
    // Predicated region
    $region26: #{tpu_custom_call.1} parent=1 // pred_check
      _
    $region27: #{tpu_custom_call.1} parent=1 // pred_check_branch
      %370 = sbr.rel (0) target = $region29
    $region28: #{tpu_custom_call.1} parent=1 // pred_region
      %s372 = ssub.s32 128, 128
      %373 = vsyncadd [#allocation4], %s372
      %s375 = sshll.u32 [#allocation8], 4
      %s376 = int_to_ptr.vmem [resolvable:$true] %s375
      %378 = dma.vmem_to_hbm [thread:$0]  %s376, 128, %s3, [#allocation4]
    $region29: #{tpu_custom_call.1} parent=1 // pred_fallthru
      _
    // Predicated region
    $region30: #{tpu_custom_call.1} parent=1 // pred_check
      _
    $region31: #{tpu_custom_call.1} parent=1 // pred_check_branch
      %380 = sbr.rel (0) target = $region33
    $region32: #{tpu_custom_call.1} parent=1 // pred_region
      %381 = dma.done [#allocation4], 128
    $region33: #{tpu_custom_call.1} parent=1 // pred_fallthru
      _
    %382 = vsyncpa [#allocation3], 1
    %383 = vsyncpa [#allocation6], 1
    %384 = vsyncpa [#allocation4], 1

</llo_original>
